<compile_context>
chip_gen: v7x
topology: tpu7x:2x2x1
jax: 0.10.0
libtpu: 0.0.40
codegen_flags: <defaults>
</compile_context>

<pallas_src>
import math

import jax
import jax.numpy as jnp
from jax.experimental import pallas as pl
from jax.experimental.pallas import tpu as pltpu


def _radial_kernel(x_ref, w1t_ref, b1_ref, w2_ref, b2_ref, o_ref):
    # x_ref:   (TM, input_dim)           compute dtype
    # w1t_ref: (input_dim, hidden_dim)   compute dtype
    # b1_ref:  (1, hidden_dim)           float32
    # w2_ref:  (output_dim, hidden_dim)  compute dtype
    # b2_ref:  (output_dim, 1)           float32
    # o_ref:   (output_dim, TM)          float32  (transposed: M is the lane axis)
    h = jnp.dot(x_ref[...], w1t_ref[...], preferred_element_type=jnp.float32)
    h = jnp.maximum(h + b1_ref[...], 0.0)  # nonlin = relu (module default)
    # Second matmul done "transposed" (contract both dim-1s) so the result is
    # (output_dim, TM): the store is lane-dense even for output_dim == 1.
    r = jax.lax.dot_general(
        w2_ref[...], h.astype(w2_ref.dtype),
        dimension_numbers=(((1,), (1,)), ((), ())),
        preferred_element_type=jnp.float32)
    o_ref[...] = (r + b2_ref[...]).astype(o_ref.dtype)


def _round_up(x, m):
    return (x + m - 1) // m * m


def radial_function(inputs, weights1, biases1, weights2, biases2,
                    compute_dtype=None, tile_m=512):
    """Pallas implementation of RadialFunction.forward with nonlin=relu.

    inputs:   (..., input_dim)
    weights1: (hidden_dim, input_dim)
    biases1:  (hidden_dim,)
    weights2: (output_dim, hidden_dim)
    biases2:  (output_dim,)
    returns:  (..., output_dim)   float32

    compute_dtype: optional dtype for x / weights feeding the MXU (e.g.
      jnp.bfloat16 on v6e/v7x to halve HBM traffic). Accumulation is float32.
    """
    hidden_dim, input_dim = weights1.shape
    output_dim = weights2.shape[0]

    lead = inputs.shape[:-1]
    m = math.prod(lead) if lead else 1
    out_dtype = jnp.float32

    if m == 0:
        return jnp.zeros((*lead, output_dim), out_dtype)

    if compute_dtype is None:
        compute_dtype = jnp.dtype(inputs.dtype)
    compute_dtype = jnp.dtype(compute_dtype)

    x2d = inputs.reshape(m, input_dim).astype(compute_dtype)

    # Tile size over M: multiple of 8 (f32 sublane), capped at tile_m.
    tm = min(tile_m, _round_up(m, 8))
    tm = _round_up(tm, 8)
    m_pad = _round_up(m, tm)
    if m_pad != m:
        x2d = jnp.pad(x2d, ((0, m_pad - m), (0, 0)))

    # Glue: pre-transpose W1 so both matmuls are plain MXU dots; biases as
    # broadcastable rows / columns.
    w1t = jnp.asarray(weights1, compute_dtype).T                 # (input_dim, hidden_dim)
    w2 = jnp.asarray(weights2, compute_dtype)                    # (output_dim, hidden_dim)
    b1 = jnp.asarray(biases1, jnp.float32).reshape(1, hidden_dim)
    b2 = jnp.asarray(biases2, jnp.float32).reshape(output_dim, 1)

    # Explicit VMEM budget (double-buffered x/out tiles + resident weights),
    # with headroom; clamp to v7x's 64 MiB physical VMEM.
    itemsize_c = compute_dtype.itemsize
    bytes_x = 2 * tm * input_dim * itemsize_c
    bytes_o = 2 * output_dim * tm * jnp.dtype(out_dtype).itemsize
    bytes_w = 2 * (w1t.size * itemsize_c + w2.size * itemsize_c
                   + b1.size * 4 + b2.size * 4)
    vmem_limit = int(min(max(4 * (bytes_x + bytes_o + bytes_w), 8 << 20), 64 << 20))

    grid = (m_pad // tm,)
    out_t = pl.pallas_call(
        _radial_kernel,
        out_shape=jax.ShapeDtypeStruct((output_dim, m_pad), out_dtype),
        grid_spec=pltpu.PrefetchScalarGridSpec(
            num_scalar_prefetch=0,
            grid=grid,
            in_specs=[
                pl.BlockSpec((tm, input_dim), lambda i: (i, 0)),          # x tile
                pl.BlockSpec((input_dim, hidden_dim), lambda i: (0, 0)),  # W1^T (resident)
                pl.BlockSpec((1, hidden_dim), lambda i: (0, 0)),          # b1   (resident)
                pl.BlockSpec((output_dim, hidden_dim), lambda i: (0, 0)), # W2   (resident)
                pl.BlockSpec((output_dim, 1), lambda i: (0, 0)),          # b2   (resident)
            ],
            out_specs=pl.BlockSpec((output_dim, tm), lambda i: (0, i)),   # lane-dense out
        ),
        compiler_params=pltpu.CompilerParams(
            dimension_semantics=("parallel",),
            vmem_limit_bytes=vmem_limit,
        ),
    )(x2d, w1t, b1, w2, b2)

    out2d = out_t.T[:m]                       # (m, output_dim); cheap XLA transpose/slice
    return out2d.reshape(*lead, output_dim)


def _xavier_uniform(key, shape):
    # nn.init.xavier_uniform_ on a (fan_out, fan_in) 2-D tensor:
    # bound = sqrt(6 / (fan_in + fan_out))
    fan_out, fan_in = shape
    bound = math.sqrt(6.0 / (fan_in + fan_out))
    return jax.random.uniform(key, shape, jnp.float32, minval=-bound, maxval=bound)


if __name__ == "__main__":
    # Small shapes: batch=2, seq=8, input_dim=32, hidden_dim=32 (defaults to
    # input_dim in the module), output_dim=1.
    batch, seq, input_dim = 2, 8, 32
    hidden_dim = input_dim
    output_dim = 1

    key = jax.random.PRNGKey(0)
    k_x, k_w1, k_w2 = jax.random.split(key, 3)

    x = jax.random.normal(k_x, (batch, seq, input_dim), jnp.float32)

    # Deterministic parameter init (Xavier-uniform weights, zero biases),
    # matching the shapes from the module's __init__.
    weights1 = _xavier_uniform(k_w1, (hidden_dim, input_dim))
    biases1 = jnp.zeros((hidden_dim,), jnp.float32)
    weights2 = _xavier_uniform(k_w2, (output_dim, hidden_dim))
    biases2 = jnp.zeros((output_dim,), jnp.float32)

    out = radial_function(x, weights1, biases1, weights2, biases2)
    out = jax.block_until_ready(out)

    # Pure-JAX reference check (same math, no Pallas).
    hidden_ref = jnp.maximum(biases1 + jnp.tensordot(x, weights1, axes=([-1], [1])), 0.0)
    radial_ref = biases2 + jnp.tensordot(hidden_ref, weights2, axes=([-1], [1]))
    assert out.shape == (batch, seq, output_dim)
    assert jnp.allclose(out, radial_ref, atol=1e-4, rtol=1e-4)

    print("KERNEL_OK")
</pallas_src>

<mosaic_0001>
module attributes {stable_mosaic.version = 11 : i64} {
  func.func @_radial_kernel(%arg0: i32, %arg1: memref<16x32xf32, #tpu.memory_space<vmem>>, %arg2: memref<32x32xf32, #tpu.memory_space<vmem>>, %arg3: memref<1x32xf32, #tpu.memory_space<vmem>>, %arg4: memref<1x32xf32, #tpu.memory_space<vmem>>, %arg5: memref<1x1xf32, #tpu.memory_space<vmem>>, %arg6: memref<1x16xf32, #tpu.memory_space<vmem>>) attributes {dimension_semantics = [#tpu.dimension_semantics<parallel>], iteration_bounds = array<i64: 1>, scalar_prefetch = 0 : i64, scratch_operands = 0 : i64, tpu.core_type = #tpu.core_type<tc>, window_params = [{transform_indices = @transform_0, window_bounds = array<i64: 16, 32>}, {pipeline_mode = #tpu.pipeline_mode<synchronous>, transform_indices = @transform_1, window_bounds = array<i64: 32, 32>}, {pipeline_mode = #tpu.pipeline_mode<synchronous>, transform_indices = @transform_2, window_bounds = array<i64: 1, 32>}, {pipeline_mode = #tpu.pipeline_mode<synchronous>, transform_indices = @transform_3, window_bounds = array<i64: 1, 32>}, {pipeline_mode = #tpu.pipeline_mode<synchronous>, transform_indices = @transform_4, window_bounds = array<i64: 1, 1>}, {transform_indices = @transform_5, window_bounds = array<i64: 1, 16>}]} {
    %c0 = arith.constant 0 : index
    %c0_0 = arith.constant 0 : index
    %0 = vector.load %arg1[%c0, %c0_0] : memref<16x32xf32, #tpu.memory_space<vmem>>, vector<16x32xf32>
    %c0_1 = arith.constant 0 : index
    %c0_2 = arith.constant 0 : index
    %1 = vector.load %arg2[%c0_1, %c0_2] : memref<32x32xf32, #tpu.memory_space<vmem>>, vector<32x32xf32>
    %cst = arith.constant dense<0.000000e+00> : vector<16x32xf32>
    %2 = tpu.matmul %0, %1, %cst {dimension_numbers = #tpu.dot_dimension_numbers<[1], [0], [0], [1], [0, 0, 1, 1], [], []>} : vector<16x32xf32>, vector<32x32xf32>, vector<16x32xf32> -> vector<16x32xf32>
    %c0_3 = arith.constant 0 : index
    %c0_4 = arith.constant 0 : index
    %3 = vector.load %arg3[%c0_3, %c0_4] : memref<1x32xf32, #tpu.memory_space<vmem>>, vector<1x32xf32>
    %4 = vector.broadcast %3 : vector<1x32xf32> to vector<16x32xf32>
    %5 = arith.addf %2, %4 : vector<16x32xf32>
    %cst_5 = arith.constant 0.000000e+00 : f32
    %6 = vector.broadcast %cst_5 : f32 to vector<16x32xf32>
    %7 = arith.maximumf %5, %6 : vector<16x32xf32>
    %c0_6 = arith.constant 0 : index
    %c0_7 = arith.constant 0 : index
    %8 = vector.load %arg4[%c0_6, %c0_7] : memref<1x32xf32, #tpu.memory_space<vmem>>, vector<1x32xf32>
    %cst_8 = arith.constant dense<0.000000e+00> : vector<1x16xf32>
    %9 = tpu.matmul %8, %7, %cst_8 {dimension_numbers = #tpu.dot_dimension_numbers<[1], [1], [0], [0], [0, 0, 1, 0], [], []>} : vector<1x32xf32>, vector<16x32xf32>, vector<1x16xf32> -> vector<1x16xf32>
    %c0_9 = arith.constant 0 : index
    %c0_10 = arith.constant 0 : index
    %10 = vector.load %arg5[%c0_9, %c0_10] : memref<1x1xf32, #tpu.memory_space<vmem>>, vector<1x1xf32>
    %11 = vector.broadcast %10 : vector<1x1xf32> to vector<1x16xf32>
    %12 = arith.addf %9, %11 : vector<1x16xf32>
    %c0_11 = arith.constant 0 : index
    %c0_12 = arith.constant 0 : index
    %13 = vector.load %arg6[%c0_11, %c0_12] : memref<1x16xf32, #tpu.memory_space<vmem>>, vector<1x16xf32>
    tpu.vector_store %arg6[%c0_11, %c0_12], %12 {strides = array<i32>} : memref<1x16xf32, #tpu.memory_space<vmem>>, vector<1x16xf32>,
    return
  }
  func.func @transform_0(%arg0: i32) -> (i32, i32) {
    %c0_i32 = arith.constant 0 : i32
    %c0_i32_0 = arith.constant 0 : i32
    return %arg0, %c0_i32 : i32, i32
  }
  func.func @transform_1(%arg0: i32) -> (i32, i32) {
    %c0_i32 = arith.constant 0 : i32
    %c0_i32_0 = arith.constant 0 : i32
    %c0_i32_1 = arith.constant 0 : i32
    return %c0_i32, %c0_i32_0 : i32, i32
  }
  func.func @transform_2(%arg0: i32) -> (i32, i32) {
    %c0_i32 = arith.constant 0 : i32
    %c0_i32_0 = arith.constant 0 : i32
    %c0_i32_1 = arith.constant 0 : i32
    return %c0_i32, %c0_i32_0 : i32, i32
  }
  func.func @transform_3(%arg0: i32) -> (i32, i32) {
    %c0_i32 = arith.constant 0 : i32
    %c0_i32_0 = arith.constant 0 : i32
    %c0_i32_1 = arith.constant 0 : i32
    return %c0_i32, %c0_i32_0 : i32, i32
  }
  func.func @transform_4(%arg0: i32) -> (i32, i32) {
    %c0_i32 = arith.constant 0 : i32
    %c0_i32_0 = arith.constant 0 : i32
    %c0_i32_1 = arith.constant 0 : i32
    return %c0_i32, %c0_i32_0 : i32, i32
  }
  func.func @transform_5(%arg0: i32) -> (i32, i32) {
    %c0_i32 = arith.constant 0 : i32
    %c0_i32_0 = arith.constant 0 : i32
    return %c0_i32, %arg0 : i32, i32
  }
}

</mosaic_0001>

<llo_original>
// kernel: tpu_custom_call.1
$region0: #{tpu_custom_call.1}
  #allocation0 [shape = 'u32[]', space=smem, size = 0x4, offset = 0x4, fixed_abs, tag = 'smem constant byte address 0x4 - core index']
  #allocation1 [shape = 'u32[144,128]{1,0:T(1,128)}', space=vmem, size = 0x12000, scoped, tag = 'internal scratch']
  #allocation2 [shape = 'f32[1,1]{1,0:T(1,128)S(1)}', space=vmem, size = 0x200, scoped, tag = 'scoped memory for tpu_custom_call.1']
  %s0 = inlined_call_operand.hbm [shape: f32[16,32], index: 0, kind: input, shape index: {}]
  %s1 = inlined_call_operand.hbm [shape: f32[32,32], index: 1, kind: input, shape index: {}]
  %s2 = inlined_call_operand.vmem [shape: f32[1,32], index: 2, kind: input, shape index: {}]
  %s3 = inlined_call_operand.vmem [shape: f32[1,32], index: 3, kind: input, shape index: {}]
  %s4 = inlined_call_operand.<no memory space> [shape: f32[1,1], index: 4, kind: input, shape index: {}]
  %s5 = inlined_call_operand.hbm [shape: f32[1,16], index: 5, kind: output, shape index: {}]
  %s6 = sld [smem:[#allocation0]]
  $region38: #{tpu_custom_call.1} parent=0
    _
  %s8 = ssub.s32 1, %s6
  %s9 = scalar_select 0, %s8, %s6
  %v10 = vstv %s4
  %11 = vst [vmem:[#allocation2] sm:$0x1] %v10
  $region1: #{tpu_custom_call.1} parent=0
    #allocation3 [shape = 'u8[8192]{0}', space=vmem, size = 0x2000, scoped, tag = 'input window, operand 0, single buffered']
    #allocation4 [shape = 's32[1]{0}', space=sflag, size = 0x4, scoped, tag = 'scoped memory for tpu_custom_call.1']
    #allocation5 [shape = 's32[1]{0}', space=sflag, size = 0x4, scoped, tag = 'scoped memory for tpu_custom_call.1']
    #allocation6 [shape = 'u8[16384]{0}', space=vmem, size = 0x4000, scoped, tag = 'input window, operand 1, single buffered']
    #allocation7 [shape = 's32[1]{0}', space=sflag, size = 0x4, scoped, tag = 'scoped memory for tpu_custom_call.1']
    #allocation8 [shape = 'u8[512]{0}', space=vmem, size = 0x400, scoped, tag = 'output window, operand 0, single buffered']
    %12 = vsyncpa [#allocation4], 0
    %13 = vsyncpa [#allocation7], 0
    %14 = vsyncpa [#allocation5], 0
    // Predicated region
    $region2: #{tpu_custom_call.1} parent=1 // pred_check
      _
    $region3: #{tpu_custom_call.1} parent=1 // pred_check_branch
      %16 = sbr.rel (0) target = $region5
    $region4: #{tpu_custom_call.1} parent=1 // pred_region
      %s18 = ssub.s32 256, 256
      %19 = vsyncadd [#allocation4], %s18
      %s20 = sshll.u32 [#allocation3], 4
      %s21 = int_to_ptr.vmem [resolvable:$true] %s20
      %26 = dma.hbm_to_vmem [thread:$0]  %s0, 256, %s21, [#allocation4], 128, 128, 8
    $region5: #{tpu_custom_call.1} parent=1 // pred_fallthru
      _
    // Predicated region
    $region6: #{tpu_custom_call.1} parent=1 // pred_check
      _
    $region7: #{tpu_custom_call.1} parent=1 // pred_check_branch
      %28 = sbr.rel (0) target = $region9
    $region8: #{tpu_custom_call.1} parent=1 // pred_region
      %s30 = ssub.s32 512, 512
      %31 = vsyncadd [#allocation7], %s30
      %s32 = sshll.u32 [#allocation6], 4
      %s33 = int_to_ptr.vmem [resolvable:$true] %s32
      %38 = dma.hbm_to_vmem [thread:$0]  %s1, 512, %s33, [#allocation7], 128, 128, 8
    $region9: #{tpu_custom_call.1} parent=1 // pred_fallthru
      _
    // Predicated region
    $region10: #{tpu_custom_call.1} parent=1 // pred_check
      _
    $region11: #{tpu_custom_call.1} parent=1 // pred_check_branch
      %40 = sbr.rel (0) target = $region13
    $region12: #{tpu_custom_call.1} parent=1 // pred_region
      _
    $region13: #{tpu_custom_call.1} parent=1 // pred_fallthru
      _
    // Predicated region
    $region14: #{tpu_custom_call.1} parent=1 // pred_check
      _
    $region15: #{tpu_custom_call.1} parent=1 // pred_check_branch
      %42 = sbr.rel (0) target = $region17
    $region16: #{tpu_custom_call.1} parent=1 // pred_region
      _
    $region17: #{tpu_custom_call.1} parent=1 // pred_fallthru
      _
    // Predicated region
    $region18: #{tpu_custom_call.1} parent=1 // pred_check
      _
    $region19: #{tpu_custom_call.1} parent=1 // pred_check_branch
      %44 = sbr.rel (0) target = $region21
    $region20: #{tpu_custom_call.1} parent=1 // pred_region
      _
    $region21: #{tpu_custom_call.1} parent=1 // pred_fallthru
      _
    // Predicated region
    $region22: #{tpu_custom_call.1} parent=1 // pred_check
      _
    $region23: #{tpu_custom_call.1} parent=1 // pred_check_branch
      %46 = sbr.rel (0) target = $region25
    $region24: #{tpu_custom_call.1} parent=1 // pred_region
      %47 = dma.done [#allocation4], 256
    $region25: #{tpu_custom_call.1} parent=1 // pred_fallthru
      _
    // Predicated region
    $region26: #{tpu_custom_call.1} parent=1 // pred_check
      _
    $region27: #{tpu_custom_call.1} parent=1 // pred_check_branch
      %49 = sbr.rel (0) target = $region29
    $region28: #{tpu_custom_call.1} parent=1 // pred_region
      %50 = dma.done [#allocation7], 512
    $region29: #{tpu_custom_call.1} parent=1 // pred_fallthru
      _
    %v51 = vld [vmem:[#allocation3] sm:$0xff]
    %v52 = vld [vmem:[#allocation3 + $0x8] sm:$0xff]
    %v53 = vld [vmem:[#allocation6] sm:$0xff]
    %v54 = vld [vmem:[#allocation6 + $0x8] sm:$0xff]
    %v55 = vld [vmem:[#allocation6 + $0x10] sm:$0xff]
    %v56 = vld [vmem:[#allocation6 + $0x18] sm:$0xff]
    %v57 = vld [vmem:[%s2] sm:$0x1]
    %v59 = vlaneseq
    %v60 = vshrl.u32 %v59, 7
    %v61 = vsub.s32 0, %v60
    %v62 = vrot.slane %v57, %v61
    %vm64 = vcmask 261120
    %v66 = vsel %vm64, %v51, 0
    %v69 = vsel %vm64, %v52, 0
    %71 = vmatprep.subr.mxu0 0.0
    %72 = vmatpush1.msra.mxu0 %v53
    %73 = vmatprep.subr.mxu0 0.0
    %74 = vmatpush1.msra.mxu0 %v54
    %75 = vmatprep.subr.mxu0 0.0
    %76 = vmatpush1.msra.mxu0 %v55
    %77 = vmatprep.subr.mxu0 0.0
    %78 = vmatpush1.msra.mxu0 %v56
    %79 = vmatprep.subr.mxu0 0.0
    %80 = vmatpush1.msra.mxu0 0.0
    %81 = vmatprep.subr.mxu0 0.0
    %82 = vmatpush1.msra.mxu0 0.0
    %83 = vmatprep.subr.mxu0 0.0
    %84 = vmatpush1.msra.mxu0 0.0
    %85 = vmatprep.subr.mxu0 0.0
    %86 = vmatpush1.msra.mxu0 0.0
    %87 = vmatprep.subr.mxu0 0.0
    %88 = vmatpush1.msra.mxu0 0.0
    %89 = vmatprep.subr.mxu0 0.0
    %90 = vmatpush1.msra.mxu0 0.0
    %91 = vmatprep.subr.mxu0 0.0
    %92 = vmatpush1.msra.mxu0 0.0
    %93 = vmatprep.subr.mxu0 0.0
    %94 = vmatpush1.msra.mxu0 0.0
    %95 = vmatprep.subr.mxu0 0.0
    %96 = vmatpush1.msra.mxu0 0.0
    %97 = vmatprep.subr.mxu0 0.0
    %98 = vmatpush1.msra.mxu0 0.0
    %99 = vmatprep.subr.mxu0 0.0
    %100 = vmatpush1.msra.mxu0 0.0
    %101 = vmatprep.subr.mxu0 0.0
    %102 = vmatpush1.msra.mxu0 0.0
    %103 = vmatprep.subr.mxu0 0.0
    %104 = vmatpush1.msra.mxu0 0.0
    %105 = vmatprep.subr.mxu0 0.0
    %106 = vmatpush1.msra.mxu0 0.0
    %107 = vmatprep.subr.mxu0 0.0
    %108 = vmatpush1.msra.mxu0 0.0
    %109 = vmatprep.subr.mxu0 0.0
    %110 = vmatpush1.msra.mxu0 0.0
    %111 = vmatprep.subr.mxu0 0.0
    %112 = vmatpush1.msra.mxu0 0.0
    %113 = vmatprep.subr.mxu0 0.0
    %114 = vmatpush1.msra.mxu0 0.0
    %115 = vmatprep.subr.mxu0 0.0
    %116 = vmatpush1.msra.mxu0 0.0
    %117 = vmatprep.subr.mxu0 0.0
    %118 = vmatpush1.msra.mxu0 0.0
    %119 = vmatprep.subr.mxu0 0.0
    %120 = vmatpush1.msra.mxu0 0.0
    %121 = vmatprep.subr.mxu0 0.0
    %122 = vmatpush1.msra.mxu0 0.0
    %123 = vmatprep.subr.mxu0 0.0
    %124 = vmatpush1.msra.mxu0 0.0
    %125 = vmatprep.subr.mxu0 0.0
    %126 = vmatpush1.msra.mxu0 0.0
    %127 = vmatprep.subr.mxu0 0.0
    %128 = vmatpush1.msra.mxu0 0.0
    %129 = vmatprep.subr.mxu0 0.0
    %130 = vmatpush1.msra.mxu0 0.0
    %131 = vmatprep.subr.mxu0 0.0
    %132 = vmatpush1.msra.mxu0 0.0
    %133 = vmatprep.subr.mxu0 0.0
    %134 = vmatpush1.msra.mxu0 0.0
    %135 = vmatprep.mubr.f32.mxu0 0.0
    %136 = vmatmul.mubr.f32.gmra.mrb[0].mxu0 %v66
    %v137 = vpop.f32.mrb[0].mxu0
    %v138 = vadd.f32 %v62, %v137
    %v139 = vpop.f32.mrb[0].mxu0
    %140 = vmatprep.mubr.f32.mxu0 0.0
    %141 = vmatmul.mubr.f32.gmra.mrb[0].mxu0 %v69
    %v142 = vpop.f32.mrb[0].mxu0
    %v143 = vadd.f32 %v62, %v142
    %v144 = vpop.f32.mrb[0].mxu0
    %145 = vdwg.mxu0
    %v146 = vmax.f32 %v138, 0.0
    %v147 = vmax.f32 %v143, 0.0
    %v148 = vld [vmem:[%s3] sm:$0x1]
    %v149 = vld [vmem:[#allocation2] sm:$0x1]
    %151 = vset.pattern.permute.xlu0 0
    %152 = vperm.xlu0 %151, %v149
    %v153 = vpop.permute.xlu0 %152
    %v155 = vlaneseq
    %v156 = vshrl.u32 %v155, 7
    %v157 = vsub.s32 0, %v156
    %v158 = vrot.slane %v153, %v157
    %v160 = vsel %vm64, %v148, 0
    %v163 = vsel %vm64, %v146, 0
    %v166 = vsel %vm64, %v147, 0
    %168 = vmatprep.subr.mxu0 0.0
    %169 = vmatpush1.xpose.msra.mxu0 %v163
    %170 = vmatprep.subr.mxu0 0.0
    %171 = vmatpush1.xpose.msra.mxu0 %v166
    %172 = vmatprep.subr.mxu0 0.0
    %173 = vmatpush1.xpose.msra.mxu0 0.0
    %174 = vmatprep.subr.mxu0 0.0
    %175 = vmatpush1.xpose.msra.mxu0 0.0
    %176 = vmatprep.subr.mxu0 0.0
    %177 = vmatpush1.xpose.msra.mxu0 0.0
    %178 = vmatprep.subr.mxu0 0.0
    %179 = vmatpush1.xpose.msra.mxu0 0.0
    %180 = vmatprep.subr.mxu0 0.0
    %181 = vmatpush1.xpose.msra.mxu0 0.0
    %182 = vmatprep.subr.mxu0 0.0
    %183 = vmatpush1.xpose.msra.mxu0 0.0
    %184 = vmatprep.subr.mxu0 0.0
    %185 = vmatpush1.xpose.msra.mxu0 0.0
    %186 = vmatprep.subr.mxu0 0.0
    %187 = vmatpush1.xpose.msra.mxu0 0.0
    %188 = vmatprep.subr.mxu0 0.0
    %189 = vmatpush1.xpose.msra.mxu0 0.0
    %190 = vmatprep.subr.mxu0 0.0
    %191 = vmatpush1.xpose.msra.mxu0 0.0
    %192 = vmatprep.subr.mxu0 0.0
    %193 = vmatpush1.xpose.msra.mxu0 0.0
    %194 = vmatprep.subr.mxu0 0.0
    %195 = vmatpush1.xpose.msra.mxu0 0.0
    %196 = vmatprep.subr.mxu0 0.0
    %197 = vmatpush1.xpose.msra.mxu0 0.0
    %198 = vmatprep.subr.mxu0 0.0
    %199 = vmatpush1.xpose.msra.mxu0 0.0
    %200 = vmatprep.subr.mxu0 0.0
    %201 = vmatpush1.xpose.msra.mxu0 0.0
    %202 = vmatprep.subr.mxu0 0.0
    %203 = vmatpush1.xpose.msra.mxu0 0.0
    %204 = vmatprep.subr.mxu0 0.0
    %205 = vmatpush1.xpose.msra.mxu0 0.0
    %206 = vmatprep.subr.mxu0 0.0
    %207 = vmatpush1.xpose.msra.mxu0 0.0
    %208 = vmatprep.subr.mxu0 0.0
    %209 = vmatpush1.xpose.msra.mxu0 0.0
    %210 = vmatprep.subr.mxu0 0.0
    %211 = vmatpush1.xpose.msra.mxu0 0.0
    %212 = vmatprep.subr.mxu0 0.0
    %213 = vmatpush1.xpose.msra.mxu0 0.0
    %214 = vmatprep.subr.mxu0 0.0
    %215 = vmatpush1.xpose.msra.mxu0 0.0
    %216 = vmatprep.subr.mxu0 0.0
    %217 = vmatpush1.xpose.msra.mxu0 0.0
    %218 = vmatprep.subr.mxu0 0.0
    %219 = vmatpush1.xpose.msra.mxu0 0.0
    %220 = vmatprep.subr.mxu0 0.0
    %221 = vmatpush1.xpose.msra.mxu0 0.0
    %222 = vmatprep.subr.mxu0 0.0
    %223 = vmatpush1.xpose.msra.mxu0 0.0
    %224 = vmatprep.subr.mxu0 0.0
    %225 = vmatpush1.xpose.msra.mxu0 0.0
    %226 = vmatprep.subr.mxu0 0.0
    %227 = vmatpush1.xpose.msra.mxu0 0.0
    %228 = vmatprep.subr.mxu0 0.0
    %229 = vmatpush1.xpose.msra.mxu0 0.0
    %230 = vmatprep.subr.mxu0 0.0
    %231 = vmatpush1.xpose.msra.mxu0 0.0
    %232 = vmatprep.mubr.f32.mxu0 0.0
    %233 = vmatmul.mubr.f32.gmra.mrb[0].mxu0 %v160
    %v234 = vpop.f32.mrb[0].mxu0
    %v235 = vadd.f32 %v158, %v234
    %v236 = vpop.f32.mrb[0].mxu0
    %237 = vdwg.mxu0
    %vm238 = vcmask 122880
    %239 = vst.msk [vmem:[#allocation8] sm:$0x1] %vm238, %v235
    // Predicated region
    $region30: #{tpu_custom_call.1} parent=1 // pred_check
      _
    $region31: #{tpu_custom_call.1} parent=1 // pred_check_branch
      %241 = sbr.rel (0) target = $region33
    $region32: #{tpu_custom_call.1} parent=1 // pred_region
      %s243 = ssub.s32 16, 16
      %244 = vsyncadd [#allocation5], %s243
      %s246 = sshll.u32 [#allocation8], 4
      %s247 = int_to_ptr.vmem [resolvable:$true] %s246
      %249 = dma.vmem_to_hbm [thread:$0]  %s247, 16, %s5, [#allocation5]
    $region33: #{tpu_custom_call.1} parent=1 // pred_fallthru
      _
    // Predicated region
    $region34: #{tpu_custom_call.1} parent=1 // pred_check
      _
    $region35: #{tpu_custom_call.1} parent=1 // pred_check_branch
      %251 = sbr.rel (0) target = $region37
    $region36: #{tpu_custom_call.1} parent=1 // pred_region
      %252 = dma.done [#allocation5], 16
    $region37: #{tpu_custom_call.1} parent=1 // pred_fallthru
      _
    %253 = vsyncpa [#allocation4], 1
    %254 = vsyncpa [#allocation7], 1
    %255 = vsyncpa [#allocation5], 1

</llo_original>
